<compile_context>
chip_gen: v7x
topology: tpu7x:2x2x1
jax: 0.10.0
libtpu: 0.0.40
codegen_flags: <defaults>
</compile_context>

<pallas_src>
import jax
import jax.numpy as jnp
from jax.experimental import pallas as pl
from jax.experimental.pallas import tpu as pltpu


def _fused_kernel(x_ref, w1_ref, w2_ref, o_ref):
    # x_ref : (nb, C, HW)  -- spatial on lanes (lane-dense)
    # w1_ref: (R, C)       -- conv1 1x1 weight (squeezed)
    # w2_ref: (C, R)       -- conv2 1x1 weight (squeezed)
    inv_hw = 1.0 / x_ref.shape[-1]
    # AdaptiveAvgPool2d(1): f32-accumulated lane reduction, no block-sized f32 temp.
    pooled = jnp.sum(x_ref[...], axis=-1, dtype=jnp.float32) * inv_hw      # (nb, C)
    # Tiny 1x1-conv MLP kept on the VPU/XLU (shapes far below the MXU tile).
    w1 = w1_ref[...].astype(jnp.float32)                                   # (R, C)
    w2 = w2_ref[...].astype(jnp.float32)                                   # (C, R)
    h = jnp.sum(pooled[:, None, :] * w1[None, :, :], axis=-1)              # (nb, R)
    h = jnp.maximum(h, 0.0)                                                # ReLU
    z = jnp.sum(h[:, None, :] * w2[None, :, :], axis=-1)                   # (nb, C)
    cw = 1.0 / (1.0 + jnp.exp(-z))                                         # Sigmoid
    # Broadcast multiply over spatial, streamed directly from the input ref so
    # no block-sized value stays live across the pool/MLP.
    o_ref[...] = x_ref[...] * cw.astype(o_ref.dtype)[:, :, None]


def _scale_kernel(x_ref, cw_ref, o_ref):
    # x_ref: (1, C, hw_tile), cw_ref: (1, C, 1) already in x dtype.
    o_ref[...] = x_ref[...] * cw_ref[...]


def _tpu_caps():
    """Generation-aware VMEM capacity / TensorCore count heuristic."""
    try:
        vmem_cap = int(getattr(pltpu.get_tpu_info(), "vmem_capacity_bytes", 64 << 20))
    except Exception:
        vmem_cap = 64 << 20
    # v7x: 64 MiB VMEM per TC, 2 TCs per chip.  v5e/v6e: 128 MiB, single TC.
    multi_tc = vmem_cap <= (80 << 20)
    return vmem_cap, multi_tc


def _pick_batch_block(n, per_batch_padded_bytes, multi_tc, target_bytes):
    """Pack batch elements per grid step, targeting large (~8 MiB) blocks to
    amortize per-step overhead.  On multi-TC chips (v7x) keep >=2 grid points
    so both TensorCores get work; on single-TC chips (v5e/v6e) just maximize
    the block size."""
    nb = max(1, target_bytes // max(1, per_batch_padded_bytes))
    nb = min(nb, n, 512)   # cap keeps the tiny-MLP intermediates bounded for small C
    if multi_tc and n >= 2:
        nb = min(nb, (n + 1) // 2)
    return max(1, int(nb))


def class_attention_forward(x_nchw, w1, w2):
    """x_nchw: (N, C, H, W); w1: (R, C) conv1 1x1 weight; w2: (C, R) conv2 1x1 weight."""
    N, C, H, W = x_nchw.shape
    R = w1.shape[0]
    HW = H * W
    itemsize = jnp.dtype(x_nchw.dtype).itemsize

    x_ncl = x_nchw.reshape(N, C, HW)          # free reshape, no transpose

    vmem_cap, multi_tc = _tpu_caps()
    limit_cap = max(16 << 20, vmem_cap - (12 << 20))       # ~52 MiB v7x, ~116 MiB v5e/v6e

    # Sublane packing: the second-minor dim (C) pads to the packing factor in VMEM.
    pack = max(8, 32 // itemsize)
    c_pad = ((C + pack - 1) // pack) * pack
    per_batch_bytes = C * HW * itemsize
    per_batch_padded = c_pad * HW * itemsize

    slab_cap = (8 << 20) if multi_tc else (20 << 20)        # per-batch slab cap for fusion
    target_block = (8 << 20) if multi_tc else (12 << 20)    # fused-path block target

    use_fused = per_batch_padded <= slab_cap
    if multi_tc and N == 1 and per_batch_bytes >= (2 << 20):
        # grid==1 would feed only one of v7x's two TensorCores; the two-pass path
        # below has an (N, hw_tiles) parallel grid and wins despite ~1.5x traffic.
        use_fused = False

    if use_fused:
        # ---------------- fused single-pass path ----------------
        nb = _pick_batch_block(N, per_batch_padded, multi_tc, target_block)
        block_padded = nb * per_batch_padded
        vmem_limit = int(min(limit_cap, max(16 << 20, 4 * block_padded + (2 << 20))))
        out_ncl = pl.pallas_call(
            _fused_kernel,
            out_shape=jax.ShapeDtypeStruct((N, C, HW), x_nchw.dtype),
            grid_spec=pltpu.PrefetchScalarGridSpec(
                num_scalar_prefetch=0,
                grid=(pl.cdiv(N, nb),),          # ragged last block handled by masking
                in_specs=[
                    pl.BlockSpec((nb, C, HW), lambda i: (i, 0, 0)),
                    pl.BlockSpec((R, C), lambda i: (0, 0)),
                    pl.BlockSpec((C, R), lambda i: (0, 0)),
                ],
                out_specs=pl.BlockSpec((nb, C, HW), lambda i: (i, 0, 0)),
            ),
            compiler_params=pltpu.CompilerParams(
                dimension_semantics=("parallel",),
                vmem_limit_bytes=vmem_limit),
        )(x_ncl, w1, w2)
        return out_ncl.reshape(N, C, H, W)

    # -------- two-pass fallback: pool + MLP in XLA (only N*C values after the mean),
    #          tiled lane-dense Pallas broadcast multiply (~1.5x HBM traffic). --------
    pooled = jnp.mean(x_ncl, axis=-1, dtype=jnp.float32)             # (N, C), f32 accumulation
    h = jnp.maximum(pooled @ w1.astype(jnp.float32).T, 0.0)          # (N, R)
    cw = jax.nn.sigmoid(h @ w2.astype(jnp.float32).T)                # (N, C)
    cw3 = cw.astype(x_nchw.dtype).reshape(N, C, 1)

    tile_target = (6 << 20) if multi_tc else (8 << 20)
    lanes = (tile_target // max(1, c_pad * itemsize)) // 128 * 128
    lanes = max(512, lanes)                                          # >=512-lane tiles
    # Keep 4x tile + slack inside the VMEM budget even for very large C.
    max_tile_bytes = max(1 << 20, (limit_cap - (2 << 20)) // 4)
    lanes = min(lanes, max(128, (max_tile_bytes // max(1, c_pad * itemsize)) // 128 * 128))
    hw_tile = HW if lanes >= HW else lanes      # multiple of 128 whenever it tiles HW

    block_padded = c_pad * hw_tile * itemsize
    vmem_limit = int(min(limit_cap, max(16 << 20, 4 * block_padded + (2 << 20))))
    out_ncl = pl.pallas_call(
        _scale_kernel,
        out_shape=jax.ShapeDtypeStruct((N, C, HW), x_nchw.dtype),
        grid_spec=pltpu.PrefetchScalarGridSpec(
            num_scalar_prefetch=0,
            grid=(N, pl.cdiv(HW, hw_tile)),      # no jnp.pad / trailing slice needed
            in_specs=[
                pl.BlockSpec((1, C, hw_tile), lambda n, t: (n, 0, t)),
                pl.BlockSpec((1, C, 1), lambda n, t: (n, 0, 0)),
            ],
            out_specs=pl.BlockSpec((1, C, hw_tile), lambda n, t: (n, 0, t)),
        ),
        compiler_params=pltpu.CompilerParams(
            dimension_semantics=("parallel", "parallel"),
            vmem_limit_bytes=vmem_limit),
    )(x_ncl, cw3)
    return out_ncl.reshape(N, C, H, W)


def _reference_forward(x, w1, w2):
    """Pure-JAX reference mirroring the PyTorch module."""
    pooled = jnp.mean(x, axis=(2, 3), keepdims=True)                 # (N, C, 1, 1)
    h = jnp.einsum('rc,nchw->nrhw', w1, pooled)                      # (N, R, 1, 1)
    h = jnp.maximum(h, 0.0)
    z = jnp.einsum('cr,nrhw->nchw', w2, h)                           # (N, C, 1, 1)
    cw = jax.nn.sigmoid(z)
    return x * cw


if __name__ == "__main__":
    # Module config (small, consistent with the forward):
    in_channels = 4
    num_classes = 3                         # attention_conv branch is unused in forward
    reduced = max(8, in_channels // 8)      # = 8

    key = jax.random.PRNGKey(0)
    kx, k1, k2 = jax.random.split(key, 3)

    N, C, H, W = 2, in_channels, 16, 16
    x = jax.random.normal(kx, (N, C, H, W), dtype=jnp.float32)

    # Conv2d 1x1 weights (bias=False), squeezed to 2-D:
    #   channel_attention conv1: (reduced, C, 1, 1) -> (reduced, C)
    #   channel_attention conv2: (C, reduced, 1, 1) -> (C, reduced)
    w1 = jax.random.normal(k1, (reduced, C), dtype=jnp.float32) * 0.1
    w2 = jax.random.normal(k2, (C, reduced), dtype=jnp.float32) * 0.1
    # TODO(synk): attention_conv (Conv2d(C, num_classes) + Sigmoid) is defined in
    # __init__ but never used in forward, so it is not implemented here.

    out = class_attention_forward(x, w1, w2)
    out = jax.block_until_ready(out)

    ref = _reference_forward(x, w1, w2)
    assert out.shape == (N, C, H, W)
    assert jnp.allclose(out, ref, atol=1e-5, rtol=1e-5), "mismatch vs reference"

    print("KERNEL_OK")
</pallas_src>

<mosaic_0001>
module attributes {stable_mosaic.version = 11 : i64} {
  func.func @_fused_kernel(%arg0: i32, %arg1: memref<1x4x256xf32, #tpu.memory_space<vmem>>, %arg2: memref<8x4xf32, #tpu.memory_space<vmem>>, %arg3: memref<4x8xf32, #tpu.memory_space<vmem>>, %arg4: memref<1x4x256xf32, #tpu.memory_space<vmem>>) attributes {dimension_semantics = [#tpu.dimension_semantics<parallel>], iteration_bounds = array<i64: 2>, scalar_prefetch = 0 : i64, scratch_operands = 0 : i64, tpu.core_type = #tpu.core_type<tc>, window_params = [{transform_indices = @transform_0, window_bounds = array<i64: 1, 4, 256>}, {pipeline_mode = #tpu.pipeline_mode<synchronous>, transform_indices = @transform_1, window_bounds = array<i64: 8, 4>}, {pipeline_mode = #tpu.pipeline_mode<synchronous>, transform_indices = @transform_2, window_bounds = array<i64: 4, 8>}, {transform_indices = @transform_3, window_bounds = array<i64: 1, 4, 256>}]} {
    %c0 = arith.constant 0 : index
    %c0_0 = arith.constant 0 : index
    %c0_1 = arith.constant 0 : index
    %0 = vector.load %arg1[%c0, %c0_0, %c0_1] : memref<1x4x256xf32, #tpu.memory_space<vmem>>, vector<1x4x256xf32>
    %cst = arith.constant dense<0.000000e+00> : vector<1x4xf32>
    %1 = vector.multi_reduction <add>, %0, %cst [2] : vector<1x4x256xf32> to vector<1x4xf32>
    %cst_2 = arith.constant 3.906250e-03 : f32
    %2 = vector.broadcast %cst_2 : f32 to vector<1x4xf32>
    %3 = arith.mulf %1, %2 : vector<1x4xf32>
    %c0_3 = arith.constant 0 : index
    %c0_4 = arith.constant 0 : index
    %4 = vector.load %arg2[%c0_3, %c0_4] : memref<8x4xf32, #tpu.memory_space<vmem>>, vector<8x4xf32>
    %c0_5 = arith.constant 0 : index
    %c0_6 = arith.constant 0 : index
    %5 = vector.load %arg3[%c0_5, %c0_6] : memref<4x8xf32, #tpu.memory_space<vmem>>, vector<4x8xf32>
    %6 = vector.shape_cast %3 : vector<1x4xf32> to vector<1x1x4xf32>
    %7 = vector.shape_cast %4 : vector<8x4xf32> to vector<1x8x4xf32>
    %8 = vector.broadcast %6 : vector<1x1x4xf32> to vector<1x8x4xf32>
    %9 = arith.mulf %8, %7 : vector<1x8x4xf32>
    %cst_7 = arith.constant dense<0.000000e+00> : vector<1x8xf32>
    %10 = vector.multi_reduction <add>, %9, %cst_7 [2] : vector<1x8x4xf32> to vector<1x8xf32>
    %cst_8 = arith.constant 0.000000e+00 : f32
    %11 = vector.broadcast %cst_8 : f32 to vector<1x8xf32>
    %12 = arith.maximumf %10, %11 : vector<1x8xf32>
    %13 = vector.shape_cast %12 : vector<1x8xf32> to vector<1x1x8xf32>
    %14 = vector.shape_cast %5 : vector<4x8xf32> to vector<1x4x8xf32>
    %15 = vector.broadcast %13 : vector<1x1x8xf32> to vector<1x4x8xf32>
    %16 = arith.mulf %15, %14 : vector<1x4x8xf32>
    %cst_9 = arith.constant dense<0.000000e+00> : vector<1x4xf32>
    %17 = vector.multi_reduction <add>, %16, %cst_9 [2] : vector<1x4x8xf32> to vector<1x4xf32>
    %cst_10 = arith.constant 0.000000e+00 : f32
    %18 = vector.broadcast %cst_10 : f32 to vector<1x4xf32>
    %19 = arith.subf %18, %17 : vector<1x4xf32>
    %20 = math.exp %19 : vector<1x4xf32>
    %cst_11 = arith.constant 1.000000e+00 : f32
    %21 = vector.broadcast %cst_11 : f32 to vector<1x4xf32>
    %22 = arith.addf %21, %20 : vector<1x4xf32>
    %cst_12 = arith.constant 1.000000e+00 : f32
    %23 = vector.broadcast %cst_12 : f32 to vector<1x4xf32>
    %24 = arith.divf %23, %22 : vector<1x4xf32>
    %c0_13 = arith.constant 0 : index
    %c0_14 = arith.constant 0 : index
    %c0_15 = arith.constant 0 : index
    %25 = vector.load %arg1[%c0_13, %c0_14, %c0_15] : memref<1x4x256xf32, #tpu.memory_space<vmem>>, vector<1x4x256xf32>
    %26 = vector.shape_cast %24 : vector<1x4xf32> to vector<1x4x1xf32>
    %27 = vector.broadcast %26 : vector<1x4x1xf32> to vector<1x4x256xf32>
    %28 = arith.mulf %25, %27 : vector<1x4x256xf32>
    %c0_16 = arith.constant 0 : index
    %c0_17 = arith.constant 0 : index
    %c0_18 = arith.constant 0 : index
    %29 = vector.load %arg4[%c0_16, %c0_17, %c0_18] : memref<1x4x256xf32, #tpu.memory_space<vmem>>, vector<1x4x256xf32>
    tpu.vector_store %arg4[%c0_16, %c0_17, %c0_18], %28 {strides = array<i32>} : memref<1x4x256xf32, #tpu.memory_space<vmem>>, vector<1x4x256xf32>,
    return
  }
  func.func @transform_0(%arg0: i32) -> (i32, i32, i32) {
    %c0_i32 = arith.constant 0 : i32
    %c0_i32_0 = arith.constant 0 : i32
    %c0_i32_1 = arith.constant 0 : i32
    return %arg0, %c0_i32, %c0_i32_0 : i32, i32, i32
  }
  func.func @transform_1(%arg0: i32) -> (i32, i32) {
    %c0_i32 = arith.constant 0 : i32
    %c0_i32_0 = arith.constant 0 : i32
    %c0_i32_1 = arith.constant 0 : i32
    return %c0_i32, %c0_i32_0 : i32, i32
  }
  func.func @transform_2(%arg0: i32) -> (i32, i32) {
    %c0_i32 = arith.constant 0 : i32
    %c0_i32_0 = arith.constant 0 : i32
    %c0_i32_1 = arith.constant 0 : i32
    return %c0_i32, %c0_i32_0 : i32, i32
  }
  func.func @transform_3(%arg0: i32) -> (i32, i32, i32) {
    %c0_i32 = arith.constant 0 : i32
    %c0_i32_0 = arith.constant 0 : i32
    %c0_i32_1 = arith.constant 0 : i32
    return %arg0, %c0_i32, %c0_i32_0 : i32, i32, i32
  }
}

</mosaic_0001>

<llo_original>
// kernel: tpu_custom_call.1
$region0: #{tpu_custom_call.1}
  #allocation0 [shape = 'u32[]', space=smem, size = 0x4, offset = 0x4, fixed_abs, tag = 'smem constant byte address 0x4 - core index']
  #allocation1 [shape = 'u32[144,128]{1,0:T(1,128)}', space=vmem, size = 0x12000, scoped, tag = 'internal scratch']
  %s0 = inlined_call_operand.hbm [shape: f32[2,4,256], index: 0, kind: input, shape index: {}]
  %s1 = inlined_call_operand.vmem [shape: f32[8,4], index: 1, kind: input, shape index: {}]
  %s2 = inlined_call_operand.vmem [shape: f32[4,8], index: 2, kind: input, shape index: {}]
  %s3 = inlined_call_operand.hbm [shape: f32[2,4,256], index: 3, kind: output, shape index: {}]
  %s4 = sld [smem:[#allocation0]]
  $region49: #{tpu_custom_call.1} parent=0
    _
  %s6 = ssub.s32 1, %s4
  %s7 = scalar_select 0, %s6, %s4
  $region1: #{tpu_custom_call.1} parent=0
    #allocation2 [shape = 'u8[8192]{0}', space=vmem, size = 0x2000, scoped, tag = 'input window, operand 0']
    #allocation3 [shape = 's32[2]{0}', space=sflag, size = 0x8, scoped, tag = 'scoped memory for tpu_custom_call.1']
    #allocation4 [shape = 's32[2]{0}', space=sflag, size = 0x8, scoped, tag = 'scoped memory for tpu_custom_call.1']
    #allocation5 [shape = 'u8[8192]{0}', space=vmem, size = 0x2000, scoped, tag = 'output window, operand 0']
    %8 = vsyncpa [#allocation3], 0
    %s9 = scalar_lea.sflag [#allocation3], 1
    %10 = vsyncpa %s9, 0
    %11 = vsyncpa [#allocation4], 0
    %s12 = scalar_lea.sflag [#allocation4], 1
    %13 = vsyncpa %s12, 0
    loop: start=0, step=1, limit=4
    $region2: #{tpu_custom_call.1} parent=1 // loop_pre_header
      _
    $region3: #{tpu_custom_call.1} parent=1 // loop_header
      %s15 = sphi 0, %s19
      %p16 = scmp.ge.s32.totalorder %s15, 4
      %s25 = sphi 0, %s27
      %s28 = sphi 0, %s25
      %s29 = sphi 0, %s28
      %s45 = sphi 0, %s29
      %s49 = sphi 0, %s49
      %s51 = sphi 0, %s49
      %s52 = sphi 0, %s51
      %s66 = sphi 0, %s52
      %s70 = sphi 0, %s70
      %s72 = sphi 0, %s70
      %s73 = sphi 0, %s72
      %s87 = sphi 0, %s73
      %s93 = sphi 0, %s95
      %s96 = sphi 0, %s93
      %s97 = sphi 0, %s96
      %s113 = sphi 0, %s97
    $region4: #{tpu_custom_call.1} parent=1 // loop_header_branch
      %18 = sbr.rel (%p16) target = $region8
    $region5: #{tpu_custom_call.1} parent=1 // loop_body
      %s20 = ssub.s32 %s15, 1
      %s21 = ssub.s32 %s15, 2
      %s22 = sadd.s32 %s15, 1
      %s23 = ssub.s32 %s15, %s22
      %p24 = scmp.eq.s32.totalorder %s23, 0
      %s26 = sadd.s32 %s25, 1
      %s27 = scalar_select %p24, %s25, %s26
      %p30 = pneg %p24
      %p31 = scmp.eq.s32.totalorder %s15, 1
      %p32 = por %p30, %p31
      %p33 = scmp.ne.s32.totalorder %s25, %s28
      %p34 = scmp.eq.s32.totalorder %s15, 0
      %p35 = por %p33, %p34
      %p36 = scmp.ne.s32.totalorder %s25, %s28
      %p37 = scmp.eq.s32.totalorder %s20, 1
      %p38 = por %p36, %p37
      %p39 = scmp.ne.s32.totalorder %s28, %s29
      %p40 = scmp.eq.s32.totalorder %s20, 0
      %p41 = por %p39, %p40
      %p42 = scmp.ne.s32.totalorder %s28, %s29
      %p43 = scmp.eq.s32.totalorder %s21, 1
      %p44 = por %p42, %p43
      %p46 = scmp.ne.s32.totalorder %s29, %s45
      %p47 = scmp.eq.s32.totalorder %s21, 0
      %p48 = por %p46, %p47
      %s50 = sadd.s32 %s49, 1
      %p53 = scmp.eq.s32.totalorder %s15, 1
      %p54 = scmp.ne.s32.totalorder %s49, %s51
      %p55 = scmp.eq.s32.totalorder %s15, 0
      %p56 = por %p54, %p55
      %p57 = scmp.ne.s32.totalorder %s49, %s51
      %p58 = scmp.eq.s32.totalorder %s20, 1
      %p59 = por %p57, %p58
      %p60 = scmp.ne.s32.totalorder %s51, %s52
      %p61 = scmp.eq.s32.totalorder %s20, 0
      %p62 = por %p60, %p61
      %p63 = scmp.ne.s32.totalorder %s51, %s52
      %p64 = scmp.eq.s32.totalorder %s21, 1
      %p65 = por %p63, %p64
      %p67 = scmp.ne.s32.totalorder %s52, %s66
      %p68 = scmp.eq.s32.totalorder %s21, 0
      %p69 = por %p67, %p68
      %s71 = sadd.s32 %s70, 1
      %p74 = scmp.eq.s32.totalorder %s15, 1
      %p75 = scmp.ne.s32.totalorder %s70, %s72
      %p76 = scmp.eq.s32.totalorder %s15, 0
      %p77 = por %p75, %p76
      %p78 = scmp.ne.s32.totalorder %s70, %s72
      %p79 = scmp.eq.s32.totalorder %s20, 1
      %p80 = por %p78, %p79
      %p81 = scmp.ne.s32.totalorder %s72, %s73
      %p82 = scmp.eq.s32.totalorder %s20, 0
      %p83 = por %p81, %p82
      %p84 = scmp.ne.s32.totalorder %s72, %s73
      %p85 = scmp.eq.s32.totalorder %s21, 1
      %p86 = por %p84, %p85
      %p88 = scmp.ne.s32.totalorder %s73, %s87
      %p89 = scmp.eq.s32.totalorder %s21, 0
      %p90 = por %p88, %p89
      %s91 = ssub.s32 %s15, %s22
      %p92 = scmp.eq.s32.totalorder %s91, 0
      %s94 = sadd.s32 %s93, 1
      %s95 = scalar_select %p92, %s93, %s94
      %p98 = pneg %p92
      %p99 = scmp.eq.s32.totalorder %s15, 1
      %p100 = por %p98, %p99
      %p101 = scmp.ne.s32.totalorder %s93, %s96
      %p102 = scmp.eq.s32.totalorder %s15, 0
      %p103 = por %p101, %p102
      %p104 = scmp.ne.s32.totalorder %s93, %s96
      %p105 = scmp.eq.s32.totalorder %s20, 1
      %p106 = por %p104, %p105
      %p107 = scmp.ne.s32.totalorder %s96, %s97
      %p108 = scmp.eq.s32.totalorder %s20, 0
      %p109 = por %p107, %p108
      %p110 = scmp.ne.s32.totalorder %s96, %s97
      %p111 = scmp.eq.s32.totalorder %s21, 1
      %p112 = por %p110, %p111
      %p114 = scmp.ne.s32.totalorder %s97, %s113
      %p115 = scmp.eq.s32.totalorder %s21, 0
      %p116 = por %p114, %p115
      %p117 = scmp.le.s32.totalorder 1, %s15
      %p118 = scmp.lt.s32.totalorder %s15, 3
      %p119 = pnand %p117, %p118
      %p120 = pneg %p119
      // Predicated region
      $region9: #{tpu_custom_call.1} parent=5 // pred_check
        _
      $region10: #{tpu_custom_call.1} parent=5 // pred_check_branch
        %122 = sbr.rel (%p119) target = $region12
      $region11: #{tpu_custom_call.1} parent=5 // pred_region
        %s123 = ssub.s32 %s15, 1
        // Predicated region
        $region13: #{tpu_custom_call.1} parent=11 // pred_check
          %p124 = pneg %p62
        $region14: #{tpu_custom_call.1} parent=11 // pred_check_branch
          %126 = sbr.rel (%p124) target = $region16
        $region15: #{tpu_custom_call.1} parent=11 // pred_region
          _
        $region16: #{tpu_custom_call.1} parent=11 // pred_fallthru
          _
        // Predicated region
        $region17: #{tpu_custom_call.1} parent=11 // pred_check
          %p127 = pneg %p83
        $region18: #{tpu_custom_call.1} parent=11 // pred_check_branch
          %129 = sbr.rel (%p127) target = $region20
        $region19: #{tpu_custom_call.1} parent=11 // pred_region
          _
        $region20: #{tpu_custom_call.1} parent=11 // pred_fallthru
          _
      $region12: #{tpu_custom_call.1} parent=5 // pred_fallthru
        _
      %p130 = scmp.lt.s32.totalorder %s15, 2
      // Predicated region
      $region21: #{tpu_custom_call.1} parent=5 // pred_check
        %p131 = pneg %p130
      $region22: #{tpu_custom_call.1} parent=5 // pred_check_branch
        %133 = sbr.rel (%p131) target = $region24
      $region23: #{tpu_custom_call.1} parent=5 // pred_region
        // Predicated region
        $region25: #{tpu_custom_call.1} parent=23 // pred_check
          %p134 = pneg %p35
        $region26: #{tpu_custom_call.1} parent=23 // pred_check_branch
          %136 = sbr.rel (%p134) target = $region28
        $region27: #{tpu_custom_call.1} parent=23 // pred_region
          %s137 = sand.u32 %s25, 1
          %s138 = scalar_lea.sflag [#allocation3], %s137
          %s139 = sand.u32 %s25, 1
          %s140 = smul.addr %s139, 8
          %s141 = scalar_lea.vmem [#allocation2], %s140
          %s143 = ssub.s32 128, 128
          %144 = vsyncadd %s138, %s143
          %s145 = smul.addr %s15, 2
          %s146 = smul.addr %s145, 64
          %s147 = scalar_lea.hbm %s0, %s146
          %s149 = sshll.u32 %s141, 4
          %s150 = int_to_ptr.vmem [resolvable:$true] %s149
          %152 = dma.hbm_to_vmem [thread:$0]  %s147, 128, %s150, %s138
        $region28: #{tpu_custom_call.1} parent=23 // pred_fallthru
          _
      $region24: #{tpu_custom_call.1} parent=5 // pred_fallthru
        _
      %p153 = scmp.le.s32.totalorder 1, %s15
      %p154 = scmp.lt.s32.totalorder %s15, 3
      %p155 = pnand %p153, %p154
      %p156 = pneg %p155
      // Predicated region
      $region29: #{tpu_custom_call.1} parent=5 // pred_check
        _
      $region30: #{tpu_custom_call.1} parent=5 // pred_check_branch
        %158 = sbr.rel (%p155) target = $region32
      $region31: #{tpu_custom_call.1} parent=5 // pred_region
        %s159 = ssub.s32 %s15, 1
        %s160 = sand.u32 %s28, 1
        %s161 = scalar_lea.sflag [#allocation3], %s160
        %s162 = sand.u32 %s28, 1
        %s163 = smul.addr %s162, 8
        %s164 = scalar_lea.vmem [#allocation2], %s163
        // Predicated region
        $region33: #{tpu_custom_call.1} parent=31 // pred_check
          %p165 = pneg %p41
        $region34: #{tpu_custom_call.1} parent=31 // pred_check_branch
          %167 = sbr.rel (%p165) target = $region36
        $region35: #{tpu_custom_call.1} parent=31 // pred_region
          %168 = dma.done %s161, 128
        $region36: #{tpu_custom_call.1} parent=31 // pred_fallthru
          _
        %s169 = sand.u32 %s28, 1
        %s170 = scalar_lea.sflag [#allocation3], %s169
        %s171 = sand.u32 %s28, 1
        %s172 = smul.addr %s171, 8
        %s173 = scalar_lea.vmem [#allocation2], %s172
        %p174 = pneg %p41
        %p175 = pneg %p38
        %p176 = pneg %p62
        %p177 = pneg %p59
        %p178 = pneg %p83
        %p179 = pneg %p80
        %p180 = pneg %p109
        %p181 = pneg %p106
        %s182 = sand.u32 %s96, 1
        %s183 = scalar_lea.sflag [#allocation4], %s182
        %s184 = sand.u32 %s96, 1
        %s185 = smul.addr %s184, 8
        %s186 = scalar_lea.vmem [#allocation5], %s185
        %v187 = vld [vmem:[%s164] sm:$0xff]
        %v189 = vcombine.high %v187, %v187
        %vm191 = vcmask 1043456
        %v192 = vsel %vm191, %v187, 0.0
        %v193 = vsel %vm191, %v189, 0.0
        %v194 = vadd.f32 %v192, %v193
        %195 = vadd.xlane.f32.xlu0 %v194
        %v196 = vpop.xlane.xlu0 %195
        %v197 = vmul.f32 %v196, 0.00390625
        %v198 = vld [vmem:[%s1] sm:$0xff]
        %v199 = vld [vmem:[%s2] sm:$0xf]
        %v201 = vlaneseq
        %v202 = vshrl.u32 %v201, 7
        %v203 = vsub.s32 0, %v202
        %v204 = vrot.slane %v198, %v203
        %206 = vbcast.lane.b32.xlu0 %v204, 256
        %v207 = vpop.permute.xlu0 %206
        %v208 = vlaneseq
        %v209 = vshrl.u32 %v208, 7
        %v210 = vsub.s32 1, %v209
        %v211 = vrot.slane %v198, %v210
        %213 = vbcast.lane.b32.xlu0 %v211, 256
        %v214 = vpop.permute.xlu0 %213
        %v215 = vlaneseq
        %v216 = vshrl.u32 %v215, 7
        %v217 = vsub.s32 2, %v216
        %v218 = vrot.slane %v198, %v217
        %220 = vbcast.lane.b32.xlu0 %v218, 256
        %v221 = vpop.permute.xlu0 %220
        %v222 = vlaneseq
        %v223 = vshrl.u32 %v222, 7
        %v224 = vsub.s32 3, %v223
        %v225 = vrot.slane %v198, %v224
        %227 = vbcast.lane.b32.xlu0 %v225, 256
        %v228 = vpop.permute.xlu0 %227
        %v229 = vlaneseq
        %v230 = vshrl.u32 %v229, 7
        %v231 = vsub.s32 4, %v230
        %v232 = vrot.slane %v198, %v231
        %234 = vbcast.lane.b32.xlu0 %v232, 256
        %v235 = vpop.permute.xlu0 %234
        %v236 = vlaneseq
        %v237 = vshrl.u32 %v236, 7
        %v238 = vsub.s32 5, %v237
        %v239 = vrot.slane %v198, %v238
        %241 = vbcast.lane.b32.xlu0 %v239, 256
        %v242 = vpop.permute.xlu0 %241
        %v243 = vlaneseq
        %v244 = vshrl.u32 %v243, 7
        %v245 = vsub.s32 6, %v244
        %v246 = vrot.slane %v198, %v245
        %248 = vbcast.lane.b32.xlu0 %v246, 256
        %v249 = vpop.permute.xlu0 %248
        %v250 = vlaneseq
        %v251 = vshrl.u32 %v250, 7
        %v252 = vsub.s32 7, %v251
        %v253 = vrot.slane %v198, %v252
        %255 = vbcast.lane.b32.xlu0 %v253, 256
        %v256 = vpop.permute.xlu0 %255
        %v265 = vmul.f32 %v197, %v207
        %v266 = vmul.f32 %v197, %v214
        %v267 = vmul.f32 %v197, %v221
        %v268 = vmul.f32 %v197, %v228
        %v269 = vmul.f32 %v197, %v235
        %v270 = vmul.f32 %v197, %v242
        %v271 = vmul.f32 %v197, %v249
        %v272 = vmul.f32 %v197, %v256
        %281 = vset.pattern.permute.xlu0 0
        %282 = vperm.xlu0 %281, %v265
        %v283 = vpop.permute.xlu0 %282
        %284 = vset.pattern.permute.xlu0 0
        %285 = vperm.xlu0 %284, %v266
        %v286 = vpop.permute.xlu0 %285
        %287 = vset.pattern.permute.xlu0 0
        %288 = vperm.xlu0 %287, %v267
        %v289 = vpop.permute.xlu0 %288
        %290 = vset.pattern.permute.xlu0 0
        %291 = vperm.xlu0 %290, %v268
        %v292 = vpop.permute.xlu0 %291
        %293 = vset.pattern.permute.xlu0 0
        %294 = vperm.xlu0 %293, %v269
        %v295 = vpop.permute.xlu0 %294
        %296 = vset.pattern.permute.xlu0 0
        %297 = vperm.xlu0 %296, %v270
        %v298 = vpop.permute.xlu0 %297
        %299 = vset.pattern.permute.xlu0 0
        %300 = vperm.xlu0 %299, %v271
        %v301 = vpop.permute.xlu0 %300
        %302 = vset.pattern.permute.xlu0 0
        %303 = vperm.xlu0 %302, %v272
        %v304 = vpop.permute.xlu0 %303
        %v305 = vlaneseq
        %v306 = vand.u32 %v305, 127
        %v307 = vlaneseq
        %v308 = vshrl.u32 %v307, 7
        %v309 = vsub.s32 %v306, %v308
        %v310 = vrot.slane %v283, %v309
        %v311 = vlaneseq
        %v312 = vshrl.u32 %v311, 7
        %v313 = vsub.s32 %v306, %v312
        %v314 = vrot.slane %v286, %v313
        %v315 = vlaneseq
        %v316 = vshrl.u32 %v315, 7
        %v317 = vsub.s32 %v306, %v316
        %v318 = vrot.slane %v289, %v317
        %v319 = vlaneseq
        %v320 = vshrl.u32 %v319, 7
        %v321 = vsub.s32 %v306, %v320
        %v322 = vrot.slane %v292, %v321
        %v323 = vlaneseq
        %v324 = vshrl.u32 %v323, 7
        %v325 = vsub.s32 %v306, %v324
        %v326 = vrot.slane %v295, %v325
        %v327 = vlaneseq
        %v328 = vshrl.u32 %v327, 7
        %v329 = vsub.s32 %v306, %v328
        %v330 = vrot.slane %v298, %v329
        %v331 = vlaneseq
        %v332 = vshrl.u32 %v331, 7
        %v333 = vsub.s32 %v306, %v332
        %v334 = vrot.slane %v301, %v333
        %v335 = vlaneseq
        %v336 = vshrl.u32 %v335, 7
        %v337 = vsub.s32 %v306, %v336
        %v338 = vrot.slane %v304, %v337
        %vm339 = vcmask 1041409
        %v340 = vsel %vm339, %v314, %v310
        %vm341 = vcmask 1042434
        %v342 = vsel %vm341, %v318, %v340
        %vm343 = vcmask 1043459
        %v344 = vsel %vm343, %v322, %v342
        %vm345 = vcmask 1044484
        %v346 = vsel %vm345, %v326, %v344
        %vm347 = vcmask 1045509
        %v348 = vsel %vm347, %v330, %v346
        %vm349 = vcmask 1046534
        %v350 = vsel %vm349, %v334, %v348
        %vm351 = vcmask 1047559
        %v352 = vsel %vm351, %v338, %v350
        %vm354 = vcmask 31744
        %v355 = vsel %vm354, %v352, 0.0
        %356 = vadd.xlane.f32.xlu0 %v355
        %v357 = vpop.xlane.xlu0 %356
        %v358 = vmax.f32 %v357, 0.0
        %v360 = vlaneseq
        %v361 = vshrl.u32 %v360, 7
        %v362 = vsub.s32 0, %v361
        %v363 = vrot.slane %v199, %v362
        %365 = vbcast.lane.b32.xlu0 %v363, 256
        %v366 = vpop.permute.xlu0 %365
        %v367 = vlaneseq
        %v368 = vshrl.u32 %v367, 7
        %v369 = vsub.s32 1, %v368
        %v370 = vrot.slane %v199, %v369
        %372 = vbcast.lane.b32.xlu0 %v370, 256
        %v373 = vpop.permute.xlu0 %372
        %v374 = vlaneseq
        %v375 = vshrl.u32 %v374, 7
        %v376 = vsub.s32 2, %v375
        %v377 = vrot.slane %v199, %v376
        %379 = vbcast.lane.b32.xlu0 %v377, 256
        %v380 = vpop.permute.xlu0 %379
        %v381 = vlaneseq
        %v382 = vshrl.u32 %v381, 7
        %v383 = vsub.s32 3, %v382
        %v384 = vrot.slane %v199, %v383
        %386 = vbcast.lane.b32.xlu0 %v384, 256
        %v387 = vpop.permute.xlu0 %386
        %v392 = vmul.f32 %v358, %v366
        %v393 = vmul.f32 %v358, %v373
        %v394 = vmul.f32 %v358, %v380
        %v395 = vmul.f32 %v358, %v387
        %400 = vset.pattern.permute.xlu0 0
        %401 = vperm.xlu0 %400, %v392
        %v402 = vpop.permute.xlu0 %401
        %403 = vset.pattern.permute.xlu0 0
        %404 = vperm.xlu0 %403, %v393
        %v405 = vpop.permute.xlu0 %404
        %406 = vset.pattern.permute.xlu0 0
        %407 = vperm.xlu0 %406, %v394
        %v408 = vpop.permute.xlu0 %407
        %409 = vset.pattern.permute.xlu0 0
        %410 = vperm.xlu0 %409, %v395
        %v411 = vpop.permute.xlu0 %410
        %v412 = vlaneseq
        %v413 = vshrl.u32 %v412, 7
        %v414 = vsub.s32 %v306, %v413
        %v415 = vrot.slane %v402, %v414
        %v416 = vlaneseq
        %v417 = vshrl.u32 %v416, 7
        %v418 = vsub.s32 %v306, %v417
        %v419 = vrot.slane %v405, %v418
        %v420 = vlaneseq
        %v421 = vshrl.u32 %v420, 7
        %v422 = vsub.s32 %v306, %v421
        %v423 = vrot.slane %v408, %v422
        %v424 = vlaneseq
        %v425 = vshrl.u32 %v424, 7
        %v426 = vsub.s32 %v306, %v425
        %v427 = vrot.slane %v411, %v426
        %v428 = vsel %vm339, %v419, %v415
        %v429 = vsel %vm341, %v423, %v428
        %v430 = vsel %vm343, %v427, %v429
        %vm432 = vcmask 60416
        %v433 = vsel %vm432, %v430, 0.0
        %434 = vadd.xlane.f32.xlu0 %v433
        %v435 = vpop.xlane.xlu0 %434
        %v436 = vsub.f32 0.0, %v435
        %v437 = vmul.f32 %v436, 1.442695
        %v438 = vpow.pop %v437
        %v439 = vadd.f32 %v438, 1.0
        %v440 = vrcp.pop %v439
        %v441 = vmul.f32 1.0, %v440
        %v444 = vunpack.c.l.s4 839922192
        %v445 = vunpack.c.0.s8 %v444
        %v446 = vlaneseq
        %v447 = vshrl.u32 %v446, 7
        %v448 = vsub.s32 %v445, %v447
        %v449 = vrot.slane %v441, %v448
        %v451 = vmul.f32 %v187, %v449
        %452 = vst [vmem:[%s186] sm:$0xff] %v451
        %s453 = sand.u32 %s96, 1
        %s454 = scalar_lea.sflag [#allocation4], %s453
        %s455 = sand.u32 %s96, 1
        %s456 = smul.addr %s455, 8
        %s457 = scalar_lea.vmem [#allocation5], %s456
        // Predicated region
        $region37: #{tpu_custom_call.1} parent=31 // pred_check
          %p458 = pneg %p106
        $region38: #{tpu_custom_call.1} parent=31 // pred_check_branch
          %460 = sbr.rel (%p458) target = $region40
        $region39: #{tpu_custom_call.1} parent=31 // pred_region
          %s462 = ssub.s32 128, 128
          %463 = vsyncadd %s454, %s462
          %s464 = smul.addr %s20, 2
          %s465 = smul.addr %s464, 64
          %s466 = scalar_lea.hbm %s3, %s465
          %s468 = sshll.u32 %s457, 4
          %s469 = int_to_ptr.vmem [resolvable:$true] %s468
          %471 = dma.vmem_to_hbm [thread:$0]  %s469, 128, %s466, %s454
        $region40: #{tpu_custom_call.1} parent=31 // pred_fallthru
          _
      $region32: #{tpu_custom_call.1} parent=5 // pred_fallthru
        _
      %p472 = scmp.le.s32.totalorder 2, %s15
      // Predicated region
      $region41: #{tpu_custom_call.1} parent=5 // pred_check
        %p473 = pneg %p472
      $region42: #{tpu_custom_call.1} parent=5 // pred_check_branch
        %475 = sbr.rel (%p473) target = $region44
      $region43: #{tpu_custom_call.1} parent=5 // pred_region
        %s476 = ssub.s32 %s15, 2
        // Predicated region
        $region45: #{tpu_custom_call.1} parent=43 // pred_check
          %p477 = pneg %p112
        $region46: #{tpu_custom_call.1} parent=43 // pred_check_branch
          %479 = sbr.rel (%p477) target = $region48
        $region47: #{tpu_custom_call.1} parent=43 // pred_region
          %s480 = sand.u32 %s97, 1
          %s481 = scalar_lea.sflag [#allocation4], %s480
          %s482 = sand.u32 %s97, 1
          %s483 = smul.addr %s482, 8
          %s484 = scalar_lea.vmem [#allocation5], %s483
          %485 = dma.done %s481, 128
        $region48: #{tpu_custom_call.1} parent=43 // pred_fallthru
          _
      $region44: #{tpu_custom_call.1} parent=5 // pred_fallthru
        _
    $region6: #{tpu_custom_call.1} parent=1 // loop_footer
      %s19 = sadd.s32 1, %s15
    $region7: #{tpu_custom_call.1} parent=1 // loop_footer_branch
      %14 = sbr.rel target = $region3
    $region8: #{tpu_custom_call.1} parent=1 // loop_exit
      _
    %486 = vsyncpa [#allocation3], 1
    %s487 = scalar_lea.sflag [#allocation3], 1
    %488 = vsyncpa %s487, 1
    %489 = vsyncpa [#allocation4], 1
    %s490 = scalar_lea.sflag [#allocation4], 1
    %491 = vsyncpa %s490, 1

</llo_original>
